<compile_context>
chip_gen: v7x
topology: tpu7x:2x2x1
jax: 0.10.0
libtpu: 0.0.40
codegen_flags: <defaults>
</compile_context>

<pallas_src>
import functools

import jax
import jax.numpy as jnp
from jax.experimental import pallas as pl
from jax.experimental.pallas import tpu as pltpu


_LANES = 128
_MAX_PARTS = 2          # leading "parallel" grid axis (2 TCs on v7x)
_MIN_TILE_ROWS = 32     # multiple of the native sublane tiling for f32/bf16/int8
_MAX_TILE_ROWS = 1024   # 1024*128*4B = 512 KiB per f32 input tile (double-buffered)


def _round_up(x, m):
    return ((x + m - 1) // m) * m


def _contrastive_loss_kernel(d_ref, t_ref, o_ref, *, margin):
    """One (tile_r, 128) tile; accumulates into the resident (8, 128) output block."""
    i = pl.program_id(1)

    @pl.when(i == 0)
    def _():
        o_ref[...] = jnp.zeros_like(o_ref)

    d = d_ref[...].astype(jnp.float32)        # (tile_r, 128)
    t = t_ref[...].astype(jnp.float32)        # narrow-dtype labels cast in-kernel

    c = jnp.maximum(margin - d, 0.0)
    cc = c * c
    # target * d^2 + (1 - target) * c^2  ==  c^2 + target * (d^2 - c^2)
    loss = cc + t * (d * d - cc)

    # Per-tile partial reduce kept on the VPU: fold row-groups of 8 onto the
    # (8, 128) accumulator (pure vreg adds; no cross-lane XLU work here).
    o_ref[...] += loss.reshape(-1, 8, _LANES).sum(axis=0)


def contrastive_loss(distance, target, margin=2.0):
    """Pallas TPU implementation of ContrastiveLoss.forward."""
    assert distance.shape == target.shape
    n = distance.size

    d_flat = distance.reshape(-1)
    t_flat = target.reshape(-1)

    # ---- choose tiling ------------------------------------------------------
    rows_needed = -(-n // _LANES)
    # Only split across cores when each part gets at least one minimum tile;
    # avoids padding tiny problems up to 2 parts worth of rows.
    num_parts = _MAX_PARTS if rows_needed >= _MAX_PARTS * _MIN_TILE_ROWS else 1
    rows_per_part = -(-rows_needed // num_parts)
    tile_r = max(_MIN_TILE_ROWS,
                 min(_MAX_TILE_ROWS, _round_up(max(rows_per_part, 1), _MIN_TILE_ROWS)))
    chunks_per_part = max(1, -(-rows_per_part // tile_r))
    total_rows = num_parts * chunks_per_part * tile_r
    total_elems = total_rows * _LANES

    # ---- pad to the packed layout (pad contributes exactly zero loss) -------
    # distance pad = 0, target pad = 1  =>  1*0^2 + 0*clamp(...)^2 == 0.
    pad = total_elems - n
    if pad:
        d_flat = jnp.concatenate([d_flat, jnp.zeros((pad,), d_flat.dtype)])
        t_flat = jnp.concatenate([t_flat, jnp.ones((pad,), t_flat.dtype)])
    d2 = d_flat.reshape(total_rows, _LANES)
    t2 = t_flat.reshape(total_rows, _LANES)

    kernel = functools.partial(_contrastive_loss_kernel, margin=float(margin))

    partials = pl.pallas_call(
        kernel,
        out_shape=jax.ShapeDtypeStruct((num_parts * 8, _LANES), jnp.float32),
        grid=(num_parts, chunks_per_part),
        in_specs=[
            pl.BlockSpec((tile_r, _LANES),
                         lambda p, i: (p * chunks_per_part + i, 0)),
            pl.BlockSpec((tile_r, _LANES),
                         lambda p, i: (p * chunks_per_part + i, 0)),
        ],
        out_specs=pl.BlockSpec((8, _LANES), lambda p, i: (p, 0)),
        compiler_params=pltpu.CompilerParams(
            dimension_semantics=("parallel", "arbitrary")),
    )(d2, t2)

    # Tiny wrapper-side finalize: cross-lane sum of the partials + 1/N scale.
    return jnp.sum(partials) * (1.0 / float(n))


def _reference_loss(distance, target, margin=2.0):
    d = distance.astype(jnp.float32)
    t = target.astype(jnp.float32)
    loss_sim = t * d**2
    loss_dis = (1.0 - t) * jnp.maximum(margin - d, 0.0) ** 2
    return jnp.mean(loss_sim + loss_dis)


if __name__ == "__main__":
    key = jax.random.PRNGKey(0)
    k_d, k_t = jax.random.split(key)

    batch = 128  # number of pairs
    # distances are non-negative (e.g. output of pairwise_distance)
    distance = jnp.abs(jax.random.normal(k_d, (batch,), dtype=jnp.float32)) * 2.0
    # target: 1 for similar pairs, 0 for dissimilar pairs (narrow dtype; cast in-kernel)
    target = jax.random.bernoulli(k_t, p=0.5, shape=(batch,)).astype(jnp.int8)

    loss = contrastive_loss(distance, target, margin=2.0)
    loss = jax.block_until_ready(loss)

    ref = jax.block_until_ready(_reference_loss(distance, target, margin=2.0))
    assert jnp.allclose(loss, ref, rtol=1e-5, atol=1e-5), (loss, ref)

    print("KERNEL_OK")
</pallas_src>

<mosaic_0001>
module attributes {stable_mosaic.version = 11 : i64} {
  func.func @_contrastive_loss_kernel(%arg0: i32, %arg1: i32, %arg2: memref<32x128xf32, #tpu.memory_space<vmem>>, %arg3: memref<32x128xi8, #tpu.memory_space<vmem>>, %arg4: memref<8x128xf32, #tpu.memory_space<vmem>>) attributes {dimension_semantics = [#tpu.dimension_semantics<parallel>, #tpu.dimension_semantics<arbitrary>], iteration_bounds = array<i64: 1, 1>, scalar_prefetch = 0 : i64, scratch_operands = 0 : i64, tpu.core_type = #tpu.core_type<tc>, window_params = [{transform_indices = @transform_0, window_bounds = array<i64: 32, 128>}, {transform_indices = @transform_1, window_bounds = array<i64: 32, 128>}, {transform_indices = @transform_2, window_bounds = array<i64: 8, 128>}]} {
    %c0_i32 = arith.constant 0 : i32
    %0 = arith.cmpi eq, %arg1, %c0_i32 : i32
    %1 = arith.extui %0 : i1 to i32
    %c0_i32_0 = arith.constant 0 : i32
    %2 = arith.cmpi ne, %1, %c0_i32_0 : i32
    scf.if %2 {
      %cst_10 = arith.constant 0.000000e+00 : f32
      %20 = vector.broadcast %cst_10 : f32 to vector<8x128xf32>
      %c0_11 = arith.constant 0 : index
      %c0_12 = arith.constant 0 : index
      %21 = vector.load %arg4[%c0_11, %c0_12] : memref<8x128xf32, #tpu.memory_space<vmem>>, vector<8x128xf32>
      tpu.vector_store %arg4[%c0_11, %c0_12], %20 {strides = array<i32>} : memref<8x128xf32, #tpu.memory_space<vmem>>, vector<8x128xf32>,
    } else {
    }
    %c0 = arith.constant 0 : index
    %c0_1 = arith.constant 0 : index
    %3 = vector.load %arg2[%c0, %c0_1] : memref<32x128xf32, #tpu.memory_space<vmem>>, vector<32x128xf32>
    %c0_2 = arith.constant 0 : index
    %c0_3 = arith.constant 0 : index
    %4 = vector.load %arg3[%c0_2, %c0_3] : memref<32x128xi8, #tpu.memory_space<vmem>>, vector<32x128xi8>
    %5 = arith.sitofp %4 : vector<32x128xi8> to vector<32x128xf32>
    %cst = arith.constant 2.000000e+00 : f32
    %6 = vector.broadcast %cst : f32 to vector<32x128xf32>
    %7 = arith.subf %6, %3 : vector<32x128xf32>
    %cst_4 = arith.constant 0.000000e+00 : f32
    %8 = vector.broadcast %cst_4 : f32 to vector<32x128xf32>
    %9 = arith.maximumf %7, %8 : vector<32x128xf32>
    %10 = arith.mulf %9, %9 : vector<32x128xf32>
    %11 = arith.mulf %3, %3 : vector<32x128xf32>
    %12 = arith.subf %11, %10 : vector<32x128xf32>
    %13 = arith.mulf %5, %12 : vector<32x128xf32>
    %14 = arith.addf %10, %13 : vector<32x128xf32>
    %c0_5 = arith.constant 0 : index
    %c0_6 = arith.constant 0 : index
    %15 = vector.load %arg4[%c0_5, %c0_6] : memref<8x128xf32, #tpu.memory_space<vmem>>, vector<8x128xf32>
    %16 = vector.shape_cast %14 : vector<32x128xf32> to vector<4x8x128xf32>
    %cst_7 = arith.constant dense<0.000000e+00> : vector<8x128xf32>
    %17 = vector.multi_reduction <add>, %16, %cst_7 [0] : vector<4x8x128xf32> to vector<8x128xf32>
    %18 = arith.addf %15, %17 : vector<8x128xf32>
    %c0_8 = arith.constant 0 : index
    %c0_9 = arith.constant 0 : index
    %19 = vector.load %arg4[%c0_8, %c0_9] : memref<8x128xf32, #tpu.memory_space<vmem>>, vector<8x128xf32>
    tpu.vector_store %arg4[%c0_8, %c0_9], %18 {strides = array<i32>} : memref<8x128xf32, #tpu.memory_space<vmem>>, vector<8x128xf32>,
    return
  }
  func.func @transform_0(%arg0: i32, %arg1: i32) -> (i32, i32) {
    %c1_i32 = arith.constant 1 : i32
    %0 = arith.muli %arg0, %c1_i32 : i32
    %1 = arith.addi %0, %arg1 : i32
    %c0_i32 = arith.constant 0 : i32
    %c0_i32_0 = arith.constant 0 : i32
    return %1, %c0_i32 : i32, i32
  }
  func.func @transform_1(%arg0: i32, %arg1: i32) -> (i32, i32) {
    %c1_i32 = arith.constant 1 : i32
    %0 = arith.muli %arg0, %c1_i32 : i32
    %1 = arith.addi %0, %arg1 : i32
    %c0_i32 = arith.constant 0 : i32
    %c0_i32_0 = arith.constant 0 : i32
    return %1, %c0_i32 : i32, i32
  }
  func.func @transform_2(%arg0: i32, %arg1: i32) -> (i32, i32) {
    %c0_i32 = arith.constant 0 : i32
    %c0_i32_0 = arith.constant 0 : i32
    return %arg0, %c0_i32 : i32, i32
  }
}

</mosaic_0001>

<llo_original>
// kernel: tpu_custom_call.1
$region0: #{tpu_custom_call.1}
  #allocation0 [shape = 'u32[]', space=smem, size = 0x4, offset = 0x4, fixed_abs, tag = 'smem constant byte address 0x4 - core index']
  #allocation1 [shape = 'u32[144,128]{1,0:T(1,128)}', space=vmem, size = 0x12000, scoped, tag = 'internal scratch']
  %s0 = inlined_call_operand.hbm [shape: f32[32,128], index: 0, kind: input, shape index: {}]
  %s1 = inlined_call_operand.hbm [shape: s8[32,128], index: 1, kind: input, shape index: {}]
  %s2 = inlined_call_operand.hbm [shape: f32[8,128], index: 2, kind: output, shape index: {}]
  %s3 = sld [smem:[#allocation0]]
  $region30: #{tpu_custom_call.1} parent=0
    _
  %s5 = ssub.s32 1, %s3
  %s6 = scalar_select 0, %s5, %s3
  $region1: #{tpu_custom_call.1} parent=0
    #allocation2 [shape = 'u8[16384]{0}', space=vmem, size = 0x4000, scoped, tag = 'input window, operand 0, single buffered']
    #allocation3 [shape = 's32[1]{0}', space=sflag, size = 0x4, scoped, tag = 'scoped memory for tpu_custom_call.1']
    #allocation4 [shape = 's32[1]{0}', space=sflag, size = 0x4, scoped, tag = 'scoped memory for tpu_custom_call.1']
    #allocation5 [shape = 'u8[4096]{0}', space=vmem, size = 0x1000, scoped, tag = 'input window, operand 1, single buffered']
    #allocation6 [shape = 's32[1]{0}', space=sflag, size = 0x4, scoped, tag = 'scoped memory for tpu_custom_call.1']
    #allocation7 [shape = 'u8[4096]{0}', space=vmem, size = 0x1000, scoped, tag = 'output window, operand 0, single buffered']
    %7 = vsyncpa [#allocation3], 0
    %8 = vsyncpa [#allocation6], 0
    %9 = vsyncpa [#allocation4], 0
    // Predicated region
    $region2: #{tpu_custom_call.1} parent=1 // pred_check
      _
    $region3: #{tpu_custom_call.1} parent=1 // pred_check_branch
      %11 = sbr.rel (0) target = $region5
    $region4: #{tpu_custom_call.1} parent=1 // pred_region
      %s12 = sadd.s32 0, 0
      %s13 = smul.u32 4, %s12
      %s15 = ssub.s32 512, 512
      %16 = vsyncadd [#allocation3], %s15
      %s17 = smul.addr %s13, 128
      %s18 = scalar_lea.hbm %s0, %s17
      %s19 = sshll.u32 [#allocation2], 4
      %s20 = int_to_ptr.vmem [resolvable:$true] %s19
      %25 = dma.hbm_to_vmem [thread:$0]  %s18, 512, %s20, [#allocation3], 128, 128, 8
    $region5: #{tpu_custom_call.1} parent=1 // pred_fallthru
      _
    // Predicated region
    $region6: #{tpu_custom_call.1} parent=1 // pred_check
      _
    $region7: #{tpu_custom_call.1} parent=1 // pred_check_branch
      %27 = sbr.rel (0) target = $region9
    $region8: #{tpu_custom_call.1} parent=1 // pred_region
      %s28 = sadd.s32 0, 0
      %s30 = ssub.s32 128, 128
      %31 = vsyncadd [#allocation6], %s30
      %s32 = smul.addr %s28, 128
      %s33 = scalar_lea.hbm %s1, %s32
      %s35 = sshll.u32 [#allocation5], 4
      %s36 = int_to_ptr.vmem [resolvable:$true] %s35
      %38 = dma.hbm_to_vmem [thread:$0]  %s33, 128, %s36, [#allocation6]
    $region9: #{tpu_custom_call.1} parent=1 // pred_fallthru
      _
    // Predicated region
    $region10: #{tpu_custom_call.1} parent=1 // pred_check
      _
    $region11: #{tpu_custom_call.1} parent=1 // pred_check_branch
      %40 = sbr.rel (0) target = $region13
    $region12: #{tpu_custom_call.1} parent=1 // pred_region
      %41 = dma.done [#allocation3], 512
    $region13: #{tpu_custom_call.1} parent=1 // pred_fallthru
      _
    // Predicated region
    $region14: #{tpu_custom_call.1} parent=1 // pred_check
      _
    $region15: #{tpu_custom_call.1} parent=1 // pred_check_branch
      %43 = sbr.rel (0) target = $region17
    $region16: #{tpu_custom_call.1} parent=1 // pred_region
      %44 = dma.done [#allocation6], 128
    $region17: #{tpu_custom_call.1} parent=1 // pred_fallthru
      _
    %s45 = sadd.s32 0, 0
    %s46 = smul.u32 4, %s45
    %s47 = sadd.s32 0, 0
    %p48 = scmp.eq.s32.totalorder 0, 0
    // Predicated region
    $region18: #{tpu_custom_call.1} parent=1 // pred_check
      %p49 = pneg %p48
    $region19: #{tpu_custom_call.1} parent=1 // pred_check_branch
      %51 = sbr.rel (%p49) target = $region21
    $region20: #{tpu_custom_call.1} parent=1 // pred_region
      %52 = vst [vmem:[#allocation7] sm:$0xff] 0.0
    $region21: #{tpu_custom_call.1} parent=1 // pred_fallthru
      _
    %v53 = vld [vmem:[#allocation2] sm:$0xff]
    %v54 = vld [vmem:[#allocation2 + $0x8] sm:$0xff]
    %v55 = vld [vmem:[#allocation2 + $0x10] sm:$0xff]
    %v56 = vld [vmem:[#allocation2 + $0x18] sm:$0xff]
    %v57 = vld [vmem:[#allocation5] sm:$0xff]
    %v58 = vunpack.c.0.s8 %v57
    %v59 = vunpack.c.1.s8 %v57
    %v60 = vunpack.c.2.s8 %v57
    %v61 = vunpack.c.3.s8 %v57
    %v62 = vcvt.s32.f32 %v58
    %v63 = vcvt.s32.f32 %v59
    %v64 = vcvt.s32.f32 %v60
    %v65 = vcvt.s32.f32 %v61
    %v66 = vsub.f32 2.0, %v53
    %v67 = vsub.f32 2.0, %v54
    %v68 = vsub.f32 2.0, %v55
    %v69 = vsub.f32 2.0, %v56
    %v70 = vmax.f32 %v66, 0.0
    %v71 = vmax.f32 %v67, 0.0
    %v72 = vmax.f32 %v68, 0.0
    %v73 = vmax.f32 %v69, 0.0
    %v74 = vmul.f32 %v70, %v70
    %v75 = vmul.f32 %v71, %v71
    %v76 = vmul.f32 %v72, %v72
    %v77 = vmul.f32 %v73, %v73
    %v78 = vmul.f32 %v53, %v53
    %v79 = vmul.f32 %v54, %v54
    %v80 = vmul.f32 %v55, %v55
    %v81 = vmul.f32 %v56, %v56
    %v82 = vsub.f32 %v78, %v74
    %v83 = vsub.f32 %v79, %v75
    %v84 = vsub.f32 %v80, %v76
    %v85 = vsub.f32 %v81, %v77
    %v86 = vmul.f32 %v62, %v82
    %v87 = vmul.f32 %v63, %v83
    %v88 = vmul.f32 %v64, %v84
    %v89 = vmul.f32 %v65, %v85
    %v90 = vadd.f32 %v74, %v86
    %v91 = vadd.f32 %v75, %v87
    %v92 = vadd.f32 %v76, %v88
    %v93 = vadd.f32 %v77, %v89
    %v94 = vld [vmem:[#allocation7] sm:$0xff]
    %v95 = vadd.f32 %v90, %v91
    %v96 = vadd.f32 %v95, %v92
    %v97 = vadd.f32 %v96, %v93
    %v98 = vadd.f32 %v94, %v97
    %99 = vst [vmem:[#allocation7] sm:$0xff] %v98
    // Predicated region
    $region22: #{tpu_custom_call.1} parent=1 // pred_check
      _
    $region23: #{tpu_custom_call.1} parent=1 // pred_check_branch
      %101 = sbr.rel (0) target = $region25
    $region24: #{tpu_custom_call.1} parent=1 // pred_region
      %s103 = ssub.s32 128, 128
      %104 = vsyncadd [#allocation4], %s103
      %s106 = sshll.u32 [#allocation7], 4
      %s107 = int_to_ptr.vmem [resolvable:$true] %s106
      %109 = dma.vmem_to_hbm [thread:$0]  %s107, 128, %s2, [#allocation4]
    $region25: #{tpu_custom_call.1} parent=1 // pred_fallthru
      _
    // Predicated region
    $region26: #{tpu_custom_call.1} parent=1 // pred_check
      _
    $region27: #{tpu_custom_call.1} parent=1 // pred_check_branch
      %111 = sbr.rel (0) target = $region29
    $region28: #{tpu_custom_call.1} parent=1 // pred_region
      %112 = dma.done [#allocation4], 128
    $region29: #{tpu_custom_call.1} parent=1 // pred_fallthru
      _
    %113 = vsyncpa [#allocation3], 1
    %114 = vsyncpa [#allocation6], 1
    %115 = vsyncpa [#allocation4], 1

</llo_original>
